<compile_context>
chip_gen: v5e
topology: v5e:2x2
jax: 0.10.0
libtpu: 0.0.40
codegen_flags: <defaults>
</compile_context>

<pallas_src>
import functools

import jax
import jax.numpy as jnp
from jax.experimental import pallas as pl
from jax.experimental.pallas import tpu as pltpu


def _round_up(a, m):
    return (a + m - 1) // m * m


def _vmem_need_bytes(tb, d_in, h_pad, o, resident_bytes, resident_bufs):
    """Conservative VMEM footprint estimate for one grid step."""
    x_stream = 2 * tb * d_in * 4          # double-buffered f32 input tiles
    out_stream = 2 * tb * o * 4           # double-buffered f32 output tiles
    hidden = 6 * tb * h_pad * 4           # f32/bf16 temporaries inside the body (headroom)
    return int(resident_bytes * resident_bufs + x_stream + out_stream + hidden)


def prepare_actor_params(params):
    """One-time weight preparation (cache this across steps).

    Casts weights to bf16, zero-pads the hidden dim to a multiple of 128
    (lane-dense; zeros are neutral through the ReLU chain) and packs the three
    biases into a single f32 buffer (one resident operand / one DMA descriptor).
    """
    w1, b1, w2, b2, w3, b3 = (params[k] for k in ("w1", "b1", "w2", "b2", "w3", "b3"))
    d_in, h = w1.shape
    o = w3.shape[1]
    h_pad = max(128, _round_up(h, 128))
    bw = max(h_pad, _round_up(o, 128))    # packed-bias lane width

    bf = jnp.bfloat16
    w1p = jnp.zeros((d_in, h_pad), bf).at[:, :h].set(w1.astype(bf))
    w2p = jnp.zeros((h_pad, h_pad), bf).at[:h, :h].set(w2.astype(bf))
    w3p = jnp.zeros((h_pad, o), bf).at[:h, :].set(w3.astype(bf))

    bias = jnp.zeros((3, bw), jnp.float32)
    bias = bias.at[0, :h].set(b1.reshape(-1).astype(jnp.float32))
    bias = bias.at[1, :h].set(b2.reshape(-1).astype(jnp.float32))
    bias = bias.at[2, :o].set(b3.reshape(-1).astype(jnp.float32))

    return {"w1": w1p, "w2": w2p, "w3": w3p, "bias": bias,
            "D_in": d_in, "H": h, "H_pad": h_pad, "O": o}


def _actor_kernel(x_ref, w1_ref, w2_ref, w3_ref, b_ref, o_ref, *, H_pad, O):
    # bf16 cast happens in VMEM (no extra HBM pass over x).
    xb = x_ref[...].astype(jnp.bfloat16)
    b1 = b_ref[0:1, :H_pad]
    b2 = b_ref[1:2, :H_pad]
    b3 = b_ref[2:3, :O]
    # layer 1: relu(x @ W1 + b1)   (bf16 operands, f32 accumulate)
    h = jnp.dot(xb, w1_ref[...], preferred_element_type=jnp.float32)
    h = jnp.maximum(h + b1, 0.0)
    # layer 2: relu(h @ W2 + b2)
    h = jnp.dot(h.astype(jnp.bfloat16), w2_ref[...], preferred_element_type=jnp.float32)
    h = jnp.maximum(h + b2, 0.0)
    # layer 3: relu(h @ W3 + b3)   (final ReLU matches the PyTorch Actor)
    h = jnp.dot(h.astype(jnp.bfloat16), w3_ref[...], preferred_element_type=jnp.float32)
    o_ref[...] = jnp.maximum(h + b3, 0.0).astype(o_ref.dtype)


def actor_forward(x, prepared, *, row_tile=512):
    """x: (B, input_size) or (input_size,). `prepared` from prepare_actor_params.
    Returns the flattened (B*output_size,) activations (PyTorch x.reshape(-1))."""
    if x.ndim == 1:
        x = x[None, :]
    B, d_in = x.shape
    assert d_in == prepared["D_in"]
    h_pad, o = prepared["H_pad"], prepared["O"]
    w1, w2, w3, bias = prepared["w1"], prepared["w2"], prepared["w3"], prepared["bias"]

    resident_bytes = (w1.size + w2.size + w3.size) * 2 + bias.size * 4

    # ---- batch row tiling --------------------------------------------------
    if B <= row_tile:
        # Split small/medium batches into (up to) two tiles so the "parallel"
        # grid axis can feed both v7x TensorCores (extra grid step costs
        # ~0.35us on single-TC v5e/v6e).
        tb = max(8, _round_up(-(-B // 2), 8))
    else:
        tb = max(8, _round_up(row_tile, 8))
    # Shrink the tile if the (double-buffered) estimate would crowd v7x's 64 MiB VMEM.
    while tb > 8 and _vmem_need_bytes(tb, d_in, h_pad, o, resident_bytes, 2) > 48 * (1 << 20):
        tb = max(8, _round_up(tb // 2, 8))
    grid = (pl.cdiv(B, tb),)   # ragged last tile -> OOB-masked loads/stores, no pad pass

    need = _vmem_need_bytes(tb, d_in, h_pad, o, resident_bytes, 2)
    vmem_limit = int(min(64 * (1 << 20), max(16 * (1 << 20), 2 * need)))

    cost = pl.CostEstimate(
        flops=int(2 * B * (d_in * h_pad + h_pad * h_pad + h_pad * o)),
        transcendentals=0,
        bytes_accessed=int(B * d_in * x.dtype.itemsize + B * o * 4 + resident_bytes),
    )

    kernel = functools.partial(_actor_kernel, H_pad=h_pad, O=o)

    def build(single_buffer_weights):
        def resident(shape):
            # Weights/bias never change across the grid (constant index_map ->
            # DMAed once).  Single-buffer them to halve their VMEM footprint.
            if single_buffer_weights:
                return pl.BlockSpec(shape, lambda i: (0, 0), pipeline_mode=pl.Buffered(1))
            return pl.BlockSpec(shape, lambda i: (0, 0))

        return pl.pallas_call(
            kernel,
            out_shape=jax.ShapeDtypeStruct((B, o), jnp.float32),
            grid=grid,
            in_specs=[
                pl.BlockSpec((tb, d_in), lambda i: (i, 0)),   # x: row-tiled, pipelined
                resident(w1.shape),
                resident(w2.shape),
                resident(w3.shape),
                resident(bias.shape),
            ],
            out_specs=pl.BlockSpec((tb, o), lambda i: (i, 0)),
            compiler_params=pltpu.CompilerParams(
                dimension_semantics=("parallel",),            # megacore batch split on v7x
                vmem_limit_bytes=vmem_limit,
            ),
            cost_estimate=cost,
        )

    try:
        out = jax.block_until_ready(build(True)(x, w1, w2, w3, bias))
    except Exception:
        # pipeline_mode=Buffered(1) not supported by this jax/libtpu combo:
        # fall back to default (double-buffered) resident specs — same results.
        out = build(False)(x, w1, w2, w3, bias)

    return out.reshape(-1)


def init_actor_params(key, input_size, hidden_size, output_size, dtype=jnp.float32):
    """Deterministic init matching nn.Linear default: U(-1/sqrt(fan_in), 1/sqrt(fan_in))."""
    keys = jax.random.split(key, 6)

    def linear(kw, kb, fan_in, fan_out):
        bound = 1.0 / jnp.sqrt(fan_in)
        w = jax.random.uniform(kw, (fan_in, fan_out), dtype, -bound, bound)
        b = jax.random.uniform(kb, (1, fan_out), dtype, -bound, bound)
        return w, b

    w1, b1 = linear(keys[0], keys[1], input_size, hidden_size)
    w2, b2 = linear(keys[2], keys[3], hidden_size, hidden_size)
    w3, b3 = linear(keys[4], keys[5], hidden_size, output_size)
    return {"w1": w1, "b1": b1, "w2": w2, "b2": b2, "w3": w3, "b3": b3}


def actor_reference_bf16(x, p):
    """Reference with the same numerics as the kernel (bf16 operands, f32 accumulate)."""
    bf, f32 = jnp.bfloat16, jnp.float32
    h = jnp.dot(x.astype(bf), p["w1"].astype(bf), preferred_element_type=f32)
    h = jnp.maximum(h + p["b1"], 0.0)
    h = jnp.dot(h.astype(bf), p["w2"].astype(bf), preferred_element_type=f32)
    h = jnp.maximum(h + p["b2"], 0.0)
    h = jnp.dot(h.astype(bf), p["w3"].astype(bf), preferred_element_type=f32)
    h = jnp.maximum(h + p["b3"], 0.0)
    return h.reshape(-1)


def actor_reference_f32(x, p):
    h = jnp.maximum(x @ p["w1"] + p["b1"], 0.0)
    h = jnp.maximum(h @ p["w2"] + p["b2"], 0.0)
    h = jnp.maximum(h @ p["w3"] + p["b3"], 0.0)
    return h.reshape(-1)


if __name__ == "__main__":
    key = jax.random.PRNGKey(0)
    k_x, k_p = jax.random.split(key)

    batch, input_size_A, hidden_size_A, output_size_A = 80, 16, 32, 4
    x = jax.random.normal(k_x, (batch, input_size_A), jnp.float32)
    params = init_actor_params(k_p, input_size_A, hidden_size_A, output_size_A)
    prepared = prepare_actor_params(params)   # one-time prep; reuse across steps

    # Default tiling: B<=row_tile -> two 40-row tiles (grid=(2,), megacore-friendly).
    out_a = jax.block_until_ready(actor_forward(x, prepared))
    # Small row_tile: grid=(3,) with a ragged, OOB-masked last tile.
    out_b = jax.block_until_ready(actor_forward(x, prepared, row_tile=32))

    assert out_a.shape == (batch * output_size_A,)
    assert out_b.shape == (batch * output_size_A,)

    ref_bf16 = actor_reference_bf16(x, params)
    ref_f32 = actor_reference_f32(x, params)
    for out in (out_a, out_b):
        # Tight check vs identical bf16-operand / f32-accumulate numerics.
        assert jnp.allclose(out, ref_bf16, atol=1e-4, rtol=1e-4)
        # Loose sanity check vs the pure-f32 PyTorch-equivalent forward.
        assert jnp.allclose(out, ref_f32, atol=5e-2, rtol=5e-2)

    print("KERNEL_OK")
</pallas_src>

<mosaic_0001>
module attributes {stable_mosaic.version = 11 : i64} {
  func.func @_actor_kernel(%arg0: i32, %arg1: memref<40x16xf32, #tpu.memory_space<vmem>>, %arg2: memref<16x128xbf16, #tpu.memory_space<vmem>>, %arg3: memref<128x128xbf16, #tpu.memory_space<vmem>>, %arg4: memref<128x4xbf16, #tpu.memory_space<vmem>>, %arg5: memref<3x128xf32, #tpu.memory_space<vmem>>, %arg6: memref<40x4xf32, #tpu.memory_space<vmem>>) attributes {dimension_semantics = [#tpu.dimension_semantics<parallel>], iteration_bounds = array<i64: 2>, scalar_prefetch = 0 : i64, scratch_operands = 0 : i64, tpu.core_type = #tpu.core_type<tc>, window_params = [{transform_indices = @transform_0, window_bounds = array<i64: 40, 16>}, {pipeline_mode = #tpu.pipeline_mode<synchronous>, transform_indices = @transform_1, window_bounds = array<i64: 16, 128>}, {pipeline_mode = #tpu.pipeline_mode<synchronous>, transform_indices = @transform_2, window_bounds = array<i64: 128, 128>}, {pipeline_mode = #tpu.pipeline_mode<synchronous>, transform_indices = @transform_3, window_bounds = array<i64: 128, 4>}, {pipeline_mode = #tpu.pipeline_mode<synchronous>, transform_indices = @transform_4, window_bounds = array<i64: 3, 128>}, {transform_indices = @transform_5, window_bounds = array<i64: 40, 4>}]} {
    %c0 = arith.constant 0 : index
    %c0_0 = arith.constant 0 : index
    %0 = vector.load %arg1[%c0, %c0_0] : memref<40x16xf32, #tpu.memory_space<vmem>>, vector<40x16xf32>
    %1 = arith.truncf %0 : vector<40x16xf32> to vector<40x16xbf16>
    %c0_1 = arith.constant 0 : index
    %c0_2 = arith.constant 0 : index
    %2 = vector.load %arg5[%c0_1, %c0_2] : memref<3x128xf32, #tpu.memory_space<vmem>>, vector<1x128xf32>
    %c1 = arith.constant 1 : index
    %c0_3 = arith.constant 0 : index
    %3 = vector.load %arg5[%c1, %c0_3] : memref<3x128xf32, #tpu.memory_space<vmem>>, vector<1x128xf32>
    %c2 = arith.constant 2 : index
    %c0_4 = arith.constant 0 : index
    %4 = vector.load %arg5[%c2, %c0_4] : memref<3x128xf32, #tpu.memory_space<vmem>>, vector<1x4xf32>
    %c0_5 = arith.constant 0 : index
    %c0_6 = arith.constant 0 : index
    %5 = vector.load %arg2[%c0_5, %c0_6] : memref<16x128xbf16, #tpu.memory_space<vmem>>, vector<16x128xbf16>
    %cst = arith.constant dense<0.000000e+00> : vector<40x128xf32>
    %6 = tpu.matmul %1, %5, %cst {dimension_numbers = #tpu.dot_dimension_numbers<[1], [0], [0], [1], [0, 0, 1, 1], [], []>} : vector<40x16xbf16>, vector<16x128xbf16>, vector<40x128xf32> -> vector<40x128xf32>
    %7 = vector.broadcast %2 : vector<1x128xf32> to vector<40x128xf32>
    %8 = arith.addf %6, %7 : vector<40x128xf32>
    %cst_7 = arith.constant 0.000000e+00 : f32
    %9 = vector.broadcast %cst_7 : f32 to vector<40x128xf32>
    %10 = arith.maximumf %8, %9 : vector<40x128xf32>
    %11 = arith.truncf %10 : vector<40x128xf32> to vector<40x128xbf16>
    %c0_8 = arith.constant 0 : index
    %c0_9 = arith.constant 0 : index
    %12 = vector.load %arg3[%c0_8, %c0_9] : memref<128x128xbf16, #tpu.memory_space<vmem>>, vector<128x128xbf16>
    %cst_10 = arith.constant dense<0.000000e+00> : vector<40x128xf32>
    %13 = tpu.matmul %11, %12, %cst_10 {dimension_numbers = #tpu.dot_dimension_numbers<[1], [0], [0], [1], [0, 0, 1, 1], [], []>} : vector<40x128xbf16>, vector<128x128xbf16>, vector<40x128xf32> -> vector<40x128xf32>
    %14 = vector.broadcast %3 : vector<1x128xf32> to vector<40x128xf32>
    %15 = arith.addf %13, %14 : vector<40x128xf32>
    %cst_11 = arith.constant 0.000000e+00 : f32
    %16 = vector.broadcast %cst_11 : f32 to vector<40x128xf32>
    %17 = arith.maximumf %15, %16 : vector<40x128xf32>
    %18 = arith.truncf %17 : vector<40x128xf32> to vector<40x128xbf16>
    %c0_12 = arith.constant 0 : index
    %c0_13 = arith.constant 0 : index
    %19 = vector.load %arg4[%c0_12, %c0_13] : memref<128x4xbf16, #tpu.memory_space<vmem>>, vector<128x4xbf16>
    %cst_14 = arith.constant dense<0.000000e+00> : vector<40x4xf32>
    %20 = tpu.matmul %18, %19, %cst_14 {dimension_numbers = #tpu.dot_dimension_numbers<[1], [0], [0], [1], [0, 0, 1, 1], [], []>} : vector<40x128xbf16>, vector<128x4xbf16>, vector<40x4xf32> -> vector<40x4xf32>
    %21 = vector.broadcast %4 : vector<1x4xf32> to vector<40x4xf32>
    %22 = arith.addf %20, %21 : vector<40x4xf32>
    %cst_15 = arith.constant 0.000000e+00 : f32
    %23 = vector.broadcast %cst_15 : f32 to vector<40x4xf32>
    %24 = arith.maximumf %22, %23 : vector<40x4xf32>
    %c0_16 = arith.constant 0 : index
    %c0_17 = arith.constant 0 : index
    %25 = vector.load %arg6[%c0_16, %c0_17] : memref<40x4xf32, #tpu.memory_space<vmem>>, vector<40x4xf32>
    tpu.vector_store %arg6[%c0_16, %c0_17], %24 {strides = array<i32>} : memref<40x4xf32, #tpu.memory_space<vmem>>, vector<40x4xf32>,
    return
  }
  func.func @transform_0(%arg0: i32) -> (i32, i32) {
    %c0_i32 = arith.constant 0 : i32
    %c0_i32_0 = arith.constant 0 : i32
    return %arg0, %c0_i32 : i32, i32
  }
  func.func @transform_1(%arg0: i32) -> (i32, i32) {
    %c0_i32 = arith.constant 0 : i32
    %c0_i32_0 = arith.constant 0 : i32
    %c0_i32_1 = arith.constant 0 : i32
    return %c0_i32, %c0_i32_0 : i32, i32
  }
  func.func @transform_2(%arg0: i32) -> (i32, i32) {
    %c0_i32 = arith.constant 0 : i32
    %c0_i32_0 = arith.constant 0 : i32
    %c0_i32_1 = arith.constant 0 : i32
    return %c0_i32, %c0_i32_0 : i32, i32
  }
  func.func @transform_3(%arg0: i32) -> (i32, i32) {
    %c0_i32 = arith.constant 0 : i32
    %c0_i32_0 = arith.constant 0 : i32
    %c0_i32_1 = arith.constant 0 : i32
    return %c0_i32, %c0_i32_0 : i32, i32
  }
  func.func @transform_4(%arg0: i32) -> (i32, i32) {
    %c0_i32 = arith.constant 0 : i32
    %c0_i32_0 = arith.constant 0 : i32
    %c0_i32_1 = arith.constant 0 : i32
    return %c0_i32, %c0_i32_0 : i32, i32
  }
  func.func @transform_5(%arg0: i32) -> (i32, i32) {
    %c0_i32 = arith.constant 0 : i32
    %c0_i32_0 = arith.constant 0 : i32
    return %arg0, %c0_i32 : i32, i32
  }
}

module attributes {stable_mosaic.version = 11 : i64} {
  func.func @_actor_kernel(%arg0: i32, %arg1: memref<40x16xf32, #tpu.memory_space<vmem>>, %arg2: memref<16x128xbf16, #tpu.memory_space<vmem>>, %arg3: memref<128x128xbf16, #tpu.memory_space<vmem>>, %arg4: memref<128x4xbf16, #tpu.memory_space<vmem>>, %arg5: memref<3x128xf32, #tpu.memory_space<vmem>>, %arg6: memref<40x4xf32, #tpu.memory_space<vmem>>) attributes {dimension_semantics = [#tpu.dimension_semantics<parallel>], iteration_bounds = array<i64: 2>, scalar_prefetch = 0 : i64, scratch_operands = 0 : i64, tpu.core_type = #tpu.core_type<tc>, window_params = [{transform_indices = @transform_0, window_bounds = array<i64: 40, 16>}, {pipeline_mode = #tpu.pipeline_mode<synchronous>, transform_indices = @transform_1, window_bounds = array<i64: 16, 128>}, {pipeline_mode = #tpu.pipeline_mode<synchronous>, transform_indices = @transform_2, window_bounds = array<i64: 128, 128>}, {pipeline_mode = #tpu.pipeline_mode<synchronous>, transform_indices = @transform_3, window_bounds = array<i64: 128, 4>}, {pipeline_mode = #tpu.pipeline_mode<synchronous>, transform_indices = @transform_4, window_bounds = array<i64: 3, 128>}, {transform_indices = @transform_5, window_bounds = array<i64: 40, 4>}]} {
    %c0 = arith.constant 0 : index
    %c0_0 = arith.constant 0 : index
    %0 = vector.load %arg1[%c0, %c0_0] : memref<40x16xf32, #tpu.memory_space<vmem>>, vector<40x16xf32>
    %1 = arith.truncf %0 : vector<40x16xf32> to vector<40x16xbf16>
    %c0_1 = arith.constant 0 : index
    %c0_2 = arith.constant 0 : index
    %2 = vector.load %arg5[%c0_1, %c0_2] : memref<3x128xf32, #tpu.memory_space<vmem>>, vector<1x128xf32>
    %c1 = arith.constant 1 : index
    %c0_3 = arith.constant 0 : index
    %3 = vector.load %arg5[%c1, %c0_3] : memref<3x128xf32, #tpu.memory_space<vmem>>, vector<1x128xf32>
    %c2 = arith.constant 2 : index
    %c0_4 = arith.constant 0 : index
    %4 = vector.load %arg5[%c2, %c0_4] : memref<3x128xf32, #tpu.memory_space<vmem>>, vector<1x4xf32>
    %c0_5 = arith.constant 0 : index
    %c0_6 = arith.constant 0 : index
    %5 = vector.load %arg2[%c0_5, %c0_6] : memref<16x128xbf16, #tpu.memory_space<vmem>>, vector<16x128xbf16>
    %cst = arith.constant dense<0.000000e+00> : vector<40x128xf32>
    %6 = tpu.matmul %1, %5, %cst {dimension_numbers = #tpu.dot_dimension_numbers<[1], [0], [0], [1], [0, 0, 1, 1], [], []>} : vector<40x16xbf16>, vector<16x128xbf16>, vector<40x128xf32> -> vector<40x128xf32>
    %7 = vector.broadcast %2 : vector<1x128xf32> to vector<40x128xf32>
    %8 = arith.addf %6, %7 : vector<40x128xf32>
    %cst_7 = arith.constant 0.000000e+00 : f32
    %9 = vector.broadcast %cst_7 : f32 to vector<40x128xf32>
    %10 = arith.maximumf %8, %9 : vector<40x128xf32>
    %11 = arith.truncf %10 : vector<40x128xf32> to vector<40x128xbf16>
    %c0_8 = arith.constant 0 : index
    %c0_9 = arith.constant 0 : index
    %12 = vector.load %arg3[%c0_8, %c0_9] : memref<128x128xbf16, #tpu.memory_space<vmem>>, vector<128x128xbf16>
    %cst_10 = arith.constant dense<0.000000e+00> : vector<40x128xf32>
    %13 = tpu.matmul %11, %12, %cst_10 {dimension_numbers = #tpu.dot_dimension_numbers<[1], [0], [0], [1], [0, 0, 1, 1], [], []>} : vector<40x128xbf16>, vector<128x128xbf16>, vector<40x128xf32> -> vector<40x128xf32>
    %14 = vector.broadcast %3 : vector<1x128xf32> to vector<40x128xf32>
    %15 = arith.addf %13, %14 : vector<40x128xf32>
    %cst_11 = arith.constant 0.000000e+00 : f32
    %16 = vector.broadcast %cst_11 : f32 to vector<40x128xf32>
    %17 = arith.maximumf %15, %16 : vector<40x128xf32>
    %18 = arith.truncf %17 : vector<40x128xf32> to vector<40x128xbf16>
    %c0_12 = arith.constant 0 : index
    %c0_13 = arith.constant 0 : index
    %19 = vector.load %arg4[%c0_12, %c0_13] : memref<128x4xbf16, #tpu.memory_space<vmem>>, vector<128x4xbf16>
    %cst_14 = arith.constant dense<0.000000e+00> : vector<40x4xf32>
    %20 = tpu.matmul %18, %19, %cst_14 {dimension_numbers = #tpu.dot_dimension_numbers<[1], [0], [0], [1], [0, 0, 1, 1], [], []>} : vector<40x128xbf16>, vector<128x4xbf16>, vector<40x4xf32> -> vector<40x4xf32>
    %21 = vector.broadcast %4 : vector<1x4xf32> to vector<40x4xf32>
    %22 = arith.addf %20, %21 : vector<40x4xf32>
    %cst_15 = arith.constant 0.000000e+00 : f32
    %23 = vector.broadcast %cst_15 : f32 to vector<40x4xf32>
    %24 = arith.maximumf %22, %23 : vector<40x4xf32>
    %c0_16 = arith.constant 0 : index
    %c0_17 = arith.constant 0 : index
    %25 = vector.load %arg6[%c0_16, %c0_17] : memref<40x4xf32, #tpu.memory_space<vmem>>, vector<40x4xf32>
    tpu.vector_store %arg6[%c0_16, %c0_17], %24 {strides = array<i32>} : memref<40x4xf32, #tpu.memory_space<vmem>>, vector<40x4xf32>,
    return
  }
  func.func @transform_0(%arg0: i32) -> (i32, i32) {
    %c0_i32 = arith.constant 0 : i32
    %c0_i32_0 = arith.constant 0 : i32
    return %arg0, %c0_i32 : i32, i32
  }
  func.func @transform_1(%arg0: i32) -> (i32, i32) {
    %c0_i32 = arith.constant 0 : i32
    %c0_i32_0 = arith.constant 0 : i32
    %c0_i32_1 = arith.constant 0 : i32
    return %c0_i32, %c0_i32_0 : i32, i32
  }
  func.func @transform_2(%arg0: i32) -> (i32, i32) {
    %c0_i32 = arith.constant 0 : i32
    %c0_i32_0 = arith.constant 0 : i32
    %c0_i32_1 = arith.constant 0 : i32
    return %c0_i32, %c0_i32_0 : i32, i32
  }
  func.func @transform_3(%arg0: i32) -> (i32, i32) {
    %c0_i32 = arith.constant 0 : i32
    %c0_i32_0 = arith.constant 0 : i32
    %c0_i32_1 = arith.constant 0 : i32
    return %c0_i32, %c0_i32_0 : i32, i32
  }
  func.func @transform_4(%arg0: i32) -> (i32, i32) {
    %c0_i32 = arith.constant 0 : i32
    %c0_i32_0 = arith.constant 0 : i32
    %c0_i32_1 = arith.constant 0 : i32
    return %c0_i32, %c0_i32_0 : i32, i32
  }
  func.func @transform_5(%arg0: i32) -> (i32, i32) {
    %c0_i32 = arith.constant 0 : i32
    %c0_i32_0 = arith.constant 0 : i32
    return %arg0, %c0_i32 : i32, i32
  }
}

</mosaic_0001>

<llo_original>
// kernel: tpu_custom_call.1
$region0: #{tpu_custom_call.1}
  #allocation0 [shape = 'u32[]', space=smem, size = 0x4, offset = 0x4, fixed_abs, tag = 'smem constant byte address 0x4 - core index']
  #allocation1 [shape = 'u32[72,128]{1,0:T(1,128)}', space=vmem, size = 0x9000, scoped, tag = 'internal scratch']
  %s0 = inlined_call_operand.vmem [shape: f32[80,16], index: 0, kind: input, shape index: {}]
  %s1 = inlined_call_operand.vmem [shape: bf16[16,128], index: 1, kind: input, shape index: {}]
  %s2 = inlined_call_operand.vmem [shape: bf16[128,128], index: 2, kind: input, shape index: {}]
  %s3 = inlined_call_operand.vmem [shape: bf16[128,4], index: 3, kind: input, shape index: {}]
  %s4 = inlined_call_operand.vmem [shape: f32[3,128], index: 4, kind: input, shape index: {}]
  %s5 = inlined_call_operand.vmem [shape: f32[80,4], index: 5, kind: output, shape index: {}]
  %s6 = sld [smem:[#allocation0]]
  $region53: #{tpu_custom_call.1} parent=0
    _
  %s8 = ssub.s32 1, %s6
  %s9 = scalar_select 0, %s8, %s6
  loop: start=0, step=1, limit=4
  $region2: #{tpu_custom_call.1} parent=0 // loop_pre_header
    _
  $region3: #{tpu_custom_call.1} parent=0 // loop_header
    %s11 = sphi 0, %s15
    %p12 = scmp.ge.s32.totalorder %s11, 4
    %s21 = sphi 0, %s23
    %s24 = sphi 0, %s21
    %s25 = sphi 0, %s24
    %s41 = sphi 0, %s25
    %s45 = sphi 0, %s45
    %s47 = sphi 0, %s45
    %s48 = sphi 0, %s47
    %s62 = sphi 0, %s48
    %s66 = sphi 0, %s66
    %s68 = sphi 0, %s66
    %s69 = sphi 0, %s68
    %s83 = sphi 0, %s69
    %s87 = sphi 0, %s87
    %s89 = sphi 0, %s87
    %s90 = sphi 0, %s89
    %s104 = sphi 0, %s90
    %s108 = sphi 0, %s108
    %s110 = sphi 0, %s108
    %s111 = sphi 0, %s110
    %s125 = sphi 0, %s111
    %s131 = sphi 0, %s133
    %s134 = sphi 0, %s131
    %s135 = sphi 0, %s134
    %s151 = sphi 0, %s135
  $region4: #{tpu_custom_call.1} parent=0 // loop_header_branch
    %14 = sbr.rel (%p12) target = $region8
  $region5: #{tpu_custom_call.1} parent=0 // loop_body
    %s16 = ssub.s32 %s11, 1
    %s17 = ssub.s32 %s11, 2
    %s18 = sadd.s32 %s11, 1
    %s19 = ssub.s32 %s11, %s18
    %p20 = scmp.eq.s32.totalorder %s19, 0
    %s22 = sadd.s32 %s21, 1
    %s23 = scalar_select %p20, %s21, %s22
    %p26 = pneg %p20
    %p27 = scmp.eq.s32.totalorder %s11, 1
    %p28 = por %p26, %p27
    %p29 = scmp.ne.s32.totalorder %s21, %s24
    %p30 = scmp.eq.s32.totalorder %s11, 0
    %p31 = por %p29, %p30
    %p32 = scmp.ne.s32.totalorder %s21, %s24
    %p33 = scmp.eq.s32.totalorder %s16, 1
    %p34 = por %p32, %p33
    %p35 = scmp.ne.s32.totalorder %s24, %s25
    %p36 = scmp.eq.s32.totalorder %s16, 0
    %p37 = por %p35, %p36
    %p38 = scmp.ne.s32.totalorder %s24, %s25
    %p39 = scmp.eq.s32.totalorder %s17, 1
    %p40 = por %p38, %p39
    %p42 = scmp.ne.s32.totalorder %s25, %s41
    %p43 = scmp.eq.s32.totalorder %s17, 0
    %p44 = por %p42, %p43
    %s46 = sadd.s32 %s45, 1
    %p49 = scmp.eq.s32.totalorder %s11, 1
    %p50 = scmp.ne.s32.totalorder %s45, %s47
    %p51 = scmp.eq.s32.totalorder %s11, 0
    %p52 = por %p50, %p51
    %p53 = scmp.ne.s32.totalorder %s45, %s47
    %p54 = scmp.eq.s32.totalorder %s16, 1
    %p55 = por %p53, %p54
    %p56 = scmp.ne.s32.totalorder %s47, %s48
    %p57 = scmp.eq.s32.totalorder %s16, 0
    %p58 = por %p56, %p57
    %p59 = scmp.ne.s32.totalorder %s47, %s48
    %p60 = scmp.eq.s32.totalorder %s17, 1
    %p61 = por %p59, %p60
    %p63 = scmp.ne.s32.totalorder %s48, %s62
    %p64 = scmp.eq.s32.totalorder %s17, 0
    %p65 = por %p63, %p64
    %s67 = sadd.s32 %s66, 1
    %p70 = scmp.eq.s32.totalorder %s11, 1
    %p71 = scmp.ne.s32.totalorder %s66, %s68
    %p72 = scmp.eq.s32.totalorder %s11, 0
    %p73 = por %p71, %p72
    %p74 = scmp.ne.s32.totalorder %s66, %s68
    %p75 = scmp.eq.s32.totalorder %s16, 1
    %p76 = por %p74, %p75
    %p77 = scmp.ne.s32.totalorder %s68, %s69
    %p78 = scmp.eq.s32.totalorder %s16, 0
    %p79 = por %p77, %p78
    %p80 = scmp.ne.s32.totalorder %s68, %s69
    %p81 = scmp.eq.s32.totalorder %s17, 1
    %p82 = por %p80, %p81
    %p84 = scmp.ne.s32.totalorder %s69, %s83
    %p85 = scmp.eq.s32.totalorder %s17, 0
    %p86 = por %p84, %p85
    %s88 = sadd.s32 %s87, 1
    %p91 = scmp.eq.s32.totalorder %s11, 1
    %p92 = scmp.ne.s32.totalorder %s87, %s89
    %p93 = scmp.eq.s32.totalorder %s11, 0
    %p94 = por %p92, %p93
    %p95 = scmp.ne.s32.totalorder %s87, %s89
    %p96 = scmp.eq.s32.totalorder %s16, 1
    %p97 = por %p95, %p96
    %p98 = scmp.ne.s32.totalorder %s89, %s90
    %p99 = scmp.eq.s32.totalorder %s16, 0
    %p100 = por %p98, %p99
    %p101 = scmp.ne.s32.totalorder %s89, %s90
    %p102 = scmp.eq.s32.totalorder %s17, 1
    %p103 = por %p101, %p102
    %p105 = scmp.ne.s32.totalorder %s90, %s104
    %p106 = scmp.eq.s32.totalorder %s17, 0
    %p107 = por %p105, %p106
    %s109 = sadd.s32 %s108, 1
    %p112 = scmp.eq.s32.totalorder %s11, 1
    %p113 = scmp.ne.s32.totalorder %s108, %s110
    %p114 = scmp.eq.s32.totalorder %s11, 0
    %p115 = por %p113, %p114
    %p116 = scmp.ne.s32.totalorder %s108, %s110
    %p117 = scmp.eq.s32.totalorder %s16, 1
    %p118 = por %p116, %p117
    %p119 = scmp.ne.s32.totalorder %s110, %s111
    %p120 = scmp.eq.s32.totalorder %s16, 0
    %p121 = por %p119, %p120
    %p122 = scmp.ne.s32.totalorder %s110, %s111
    %p123 = scmp.eq.s32.totalorder %s17, 1
    %p124 = por %p122, %p123
    %p126 = scmp.ne.s32.totalorder %s111, %s125
    %p127 = scmp.eq.s32.totalorder %s17, 0
    %p128 = por %p126, %p127
    %s129 = ssub.s32 %s11, %s18
    %p130 = scmp.eq.s32.totalorder %s129, 0
    %s132 = sadd.s32 %s131, 1
    %s133 = scalar_select %p130, %s131, %s132
    %p136 = pneg %p130
    %p137 = scmp.eq.s32.totalorder %s11, 1
    %p138 = por %p136, %p137
    %p139 = scmp.ne.s32.totalorder %s131, %s134
    %p140 = scmp.eq.s32.totalorder %s11, 0
    %p141 = por %p139, %p140
    %p142 = scmp.ne.s32.totalorder %s131, %s134
    %p143 = scmp.eq.s32.totalorder %s16, 1
    %p144 = por %p142, %p143
    %p145 = scmp.ne.s32.totalorder %s134, %s135
    %p146 = scmp.eq.s32.totalorder %s16, 0
    %p147 = por %p145, %p146
    %p148 = scmp.ne.s32.totalorder %s134, %s135
    %p149 = scmp.eq.s32.totalorder %s17, 1
    %p150 = por %p148, %p149
    %p152 = scmp.ne.s32.totalorder %s135, %s151
    %p153 = scmp.eq.s32.totalorder %s17, 0
    %p154 = por %p152, %p153
    %p155 = scmp.le.s32.totalorder 1, %s11
    %p156 = scmp.lt.s32.totalorder %s11, 3
    %p157 = pnand %p155, %p156
    %p158 = pneg %p157
    // Predicated region
    $region9: #{tpu_custom_call.1} parent=5 // pred_check
      _
    $region10: #{tpu_custom_call.1} parent=5 // pred_check_branch
      %160 = sbr.rel (%p157) target = $region12
    $region11: #{tpu_custom_call.1} parent=5 // pred_region
      %s161 = ssub.s32 %s11, 1
      // Predicated region
      $region13: #{tpu_custom_call.1} parent=11 // pred_check
        %p162 = pneg %p58
      $region14: #{tpu_custom_call.1} parent=11 // pred_check_branch
        %164 = sbr.rel (%p162) target = $region16
      $region15: #{tpu_custom_call.1} parent=11 // pred_region
        _
      $region16: #{tpu_custom_call.1} parent=11 // pred_fallthru
        _
      // Predicated region
      $region17: #{tpu_custom_call.1} parent=11 // pred_check
        %p165 = pneg %p79
      $region18: #{tpu_custom_call.1} parent=11 // pred_check_branch
        %167 = sbr.rel (%p165) target = $region20
      $region19: #{tpu_custom_call.1} parent=11 // pred_region
        _
      $region20: #{tpu_custom_call.1} parent=11 // pred_fallthru
        _
      // Predicated region
      $region21: #{tpu_custom_call.1} parent=11 // pred_check
        %p168 = pneg %p100
      $region22: #{tpu_custom_call.1} parent=11 // pred_check_branch
        %170 = sbr.rel (%p168) target = $region24
      $region23: #{tpu_custom_call.1} parent=11 // pred_region
        _
      $region24: #{tpu_custom_call.1} parent=11 // pred_fallthru
        _
      // Predicated region
      $region25: #{tpu_custom_call.1} parent=11 // pred_check
        %p171 = pneg %p121
      $region26: #{tpu_custom_call.1} parent=11 // pred_check_branch
        %173 = sbr.rel (%p171) target = $region28
      $region27: #{tpu_custom_call.1} parent=11 // pred_region
        _
      $region28: #{tpu_custom_call.1} parent=11 // pred_fallthru
        _
    $region12: #{tpu_custom_call.1} parent=5 // pred_fallthru
      _
    %p174 = scmp.lt.s32.totalorder %s11, 2
    // Predicated region
    $region29: #{tpu_custom_call.1} parent=5 // pred_check
      %p175 = pneg %p174
    $region30: #{tpu_custom_call.1} parent=5 // pred_check_branch
      %177 = sbr.rel (%p175) target = $region32
    $region31: #{tpu_custom_call.1} parent=5 // pred_region
      // Predicated region
      $region33: #{tpu_custom_call.1} parent=31 // pred_check
        %p178 = pneg %p31
      $region34: #{tpu_custom_call.1} parent=31 // pred_check_branch
        %180 = sbr.rel (%p178) target = $region36
      $region35: #{tpu_custom_call.1} parent=31 // pred_region
        %s181 = smul.u32 5, %s11
        %p182 = scmp.lt.s32.totalorder %s181, 9
        %s183 = scalar_select %p182, %s181, 9
        %s184 = smul.addr %s183, 8
        %s185 = scalar_lea.vmem %s0, %s184
        %s186 = smul.u32 5, %s11
      $region36: #{tpu_custom_call.1} parent=31 // pred_fallthru
        _
    $region32: #{tpu_custom_call.1} parent=5 // pred_fallthru
      _
    %p187 = scmp.le.s32.totalorder 1, %s11
    %p188 = scmp.lt.s32.totalorder %s11, 3
    %p189 = pnand %p187, %p188
    %p190 = pneg %p189
    // Predicated region
    $region37: #{tpu_custom_call.1} parent=5 // pred_check
      _
    $region38: #{tpu_custom_call.1} parent=5 // pred_check_branch
      %192 = sbr.rel (%p189) target = $region40
    $region39: #{tpu_custom_call.1} parent=5 // pred_region
      %s193 = ssub.s32 %s11, 1
      %s194 = smul.u32 5, %s16
      %p195 = scmp.lt.s32.totalorder %s194, 9
      %s196 = scalar_select %p195, %s194, 9
      %s197 = smul.addr %s196, 8
      %s198 = scalar_lea.vmem %s0, %s197
      %p199 = pneg %p37
      %p200 = pneg %p34
      %p201 = pneg %p58
      %p202 = pneg %p55
      %p203 = pneg %p79
      %p204 = pneg %p76
      %p205 = pneg %p100
      %p206 = pneg %p97
      %p207 = pneg %p121
      %p208 = pneg %p118
      %p209 = pneg %p147
      %p210 = pneg %p144
      %s211 = smul.u32 5, %s16
      %p212 = scmp.lt.s32.totalorder %s211, 9
      %s213 = scalar_select %p212, %s211, 9
      %s214 = smul.addr %s213, 8
      %s215 = scalar_lea.vmem %s5, %s214
      %s216 = smul.u32 5, %s16
      %p217 = scmp.lt.s32.totalorder %s216, 9
      %s218 = scalar_select %p217, %s216, 9
      %s219 = smul.addr %s218, 8
      %s220 = scalar_lea.vmem %s0, %s219
      %s221 = smul.u32 5, %s16
      %s222 = smul.u32 5, %s16
      %p223 = scmp.lt.s32.totalorder %s222, 9
      %s224 = scalar_select %p223, %s222, 9
      %s225 = smul.addr %s224, 8
      %s226 = scalar_lea.vmem %s5, %s225
      %s227 = smul.u32 5, %s16
      %v229 = vld [vmem:[%s220] sm:$0xff]
      %v230 = vld [vmem:[%s220 + $0x8] sm:$0xff]
      %v231 = vld [vmem:[%s220 + $0x10] sm:$0xff]
      %v232 = vld [vmem:[%s220 + $0x18] sm:$0xff]
      %v233 = vld [vmem:[%s220 + $0x20] sm:$0xff]
      %v234 = vpack.c.bf16 %v230, %v229
      %v235 = vpack.c.bf16 %v232, %v231
      %v236 = vpack.c.bf16 %v233, %v233
      %v237 = vld [vmem:[%s4] sm:$0x1]
      %v238 = vld [vmem:[%s4 + $0x1] sm:$0x1]
      %v239 = vld [vmem:[%s4 + $0x2] sm:$0x1]
      %v240 = vld [vmem:[%s1] sm:$0xf]
      %v241 = vld [vmem:[%s1 + $0x4] sm:$0xf]
      %v242 = vperm.slane %v237, 0
      %v245 = vunpack.c.l.b16 %v240
      %v246 = vunpack.c.l.b16 %v241
      %v247 = vpack.c.b16 %v246, %v245
      %vm249 = vcmask 130048
      %v251 = vsel %vm249, %v234, 0
      %v254 = vsel %vm249, %v235, 0
      %v257 = vsel %vm249, %v236, 0
      %259 = vmatpush.bf16.msra.mxu0 0
      %260 = vmatpush.bf16.msra.mxu0 0
      %261 = vmatpush.bf16.msra.mxu0 0
      %262 = vmatpush.bf16.msra.mxu0 0
      %263 = vmatpush.bf16.msra.mxu0 0
      %264 = vmatpush.bf16.msra.mxu0 0
      %265 = vmatpush.bf16.msra.mxu0 0
      %266 = vmatpush.bf16.msra.mxu0 %v247
      %267 = vmatmul.bf16.gmra.mxu0 %v251
      %v268 = vpop.f32.mrf.mxu0
      %v269 = vadd.f32 %v242, %v268
      %v270 = vpop.f32.mrf.mxu0
      %v271 = vadd.f32 %v242, %v270
      %272 = vmatmul.bf16.gmra.mxu0 %v254
      %v273 = vpop.f32.mrf.mxu0
      %v274 = vadd.f32 %v242, %v273
      %v275 = vpop.f32.mrf.mxu0
      %v276 = vadd.f32 %v242, %v275
      %277 = vmatmul.bf16.gmra.mxu0 %v257
      %v278 = vpop.f32.mrf.mxu0
      %v279 = vadd.f32 %v242, %v278
      %v280 = vpop.f32.mrf.mxu0
      %281 = vdwg.mxu0
      %v282 = vmax.f32 %v269, 0.0
      %v283 = vmax.f32 %v271, 0.0
      %v284 = vmax.f32 %v274, 0.0
      %v285 = vmax.f32 %v276, 0.0
      %v286 = vmax.f32 %v279, 0.0
      %v287 = vpack.c.bf16 %v283, %v282
      %v288 = vpack.c.bf16 %v285, %v284
      %v289 = vpack.c.bf16 %v286, %v286
      %v290 = vld [vmem:[%s2] sm:$0xf]
      %v291 = vld [vmem:[%s2 + $0x4] sm:$0xf]
      %v292 = vld [vmem:[%s2 + $0x8] sm:$0xf]
      %v293 = vld [vmem:[%s2 + $0xc] sm:$0xf]
      %v294 = vld [vmem:[%s2 + $0x10] sm:$0xf]
      %v295 = vld [vmem:[%s2 + $0x14] sm:$0xf]
      %v296 = vld [vmem:[%s2 + $0x18] sm:$0xf]
      %v297 = vld [vmem:[%s2 + $0x1c] sm:$0xf]
      %v298 = vld [vmem:[%s2 + $0x20] sm:$0xf]
      %v299 = vld [vmem:[%s2 + $0x24] sm:$0xf]
      %v300 = vld [vmem:[%s2 + $0x28] sm:$0xf]
      %v301 = vld [vmem:[%s2 + $0x2c] sm:$0xf]
      %v302 = vld [vmem:[%s2 + $0x30] sm:$0xf]
      %v303 = vld [vmem:[%s2 + $0x34] sm:$0xf]
      %v304 = vld [vmem:[%s2 + $0x38] sm:$0xf]
      %v305 = vld [vmem:[%s2 + $0x3c] sm:$0xf]
      %v306 = vperm.slane %v238, 0
      %v323 = vunpack.c.l.b16 %v290
      %v324 = vunpack.c.l.b16 %v291
      %v325 = vunpack.c.l.b16 %v292
      %v326 = vunpack.c.l.b16 %v293
      %v327 = vunpack.c.l.b16 %v294
      %v328 = vunpack.c.l.b16 %v295
      %v329 = vunpack.c.l.b16 %v296
      %v330 = vunpack.c.l.b16 %v297
      %v331 = vunpack.c.l.b16 %v298
      %v332 = vunpack.c.l.b16 %v299
      %v333 = vunpack.c.l.b16 %v300
      %v334 = vunpack.c.l.b16 %v301
      %v335 = vunpack.c.l.b16 %v302
      %v336 = vunpack.c.l.b16 %v303
      %v337 = vunpack.c.l.b16 %v304
      %v338 = vunpack.c.l.b16 %v305
      %v339 = vpack.c.b16 %v324, %v323
      %v340 = vpack.c.b16 %v326, %v325
      %v341 = vpack.c.b16 %v328, %v327
      %v342 = vpack.c.b16 %v330, %v329
      %v343 = vpack.c.b16 %v332, %v331
      %v344 = vpack.c.b16 %v334, %v333
      %v345 = vpack.c.b16 %v336, %v335
      %v346 = vpack.c.b16 %v338, %v337
      %355 = vmatpush.bf16.msra.mxu0 %v346
      %356 = vmatpush.bf16.msra.mxu0 %v345
      %357 = vmatpush.bf16.msra.mxu0 %v344
      %358 = vmatpush.bf16.msra.mxu0 %v343
      %359 = vmatpush.bf16.msra.mxu0 %v342
      %360 = vmatpush.bf16.msra.mxu0 %v341
      %361 = vmatpush.bf16.msra.mxu0 %v340
      %362 = vmatpush.bf16.msra.mxu0 %v339
      %363 = vmatmul.bf16.gmra.mxu0 %v287
      %v364 = vpop.f32.mrf.mxu0
      %v365 = vadd.f32 %v306, %v364
      %v366 = vpop.f32.mrf.mxu0
      %v367 = vadd.f32 %v306, %v366
      %368 = vmatmul.bf16.gmra.mxu0 %v288
      %v369 = vpop.f32.mrf.mxu0
      %v370 = vadd.f32 %v306, %v369
      %v371 = vpop.f32.mrf.mxu0
      %v372 = vadd.f32 %v306, %v371
      %373 = vmatmul.bf16.gmra.mxu0 %v289
      %v374 = vpop.f32.mrf.mxu0
      %v375 = vadd.f32 %v306, %v374
      %v376 = vpop.f32.mrf.mxu0
      %377 = vdwg.mxu0
      %v378 = vmax.f32 %v365, 0.0
      %v379 = vmax.f32 %v367, 0.0
      %v380 = vmax.f32 %v370, 0.0
      %v381 = vmax.f32 %v372, 0.0
      %v382 = vmax.f32 %v375, 0.0
      %v383 = vpack.c.bf16 %v379, %v378
      %v384 = vpack.c.bf16 %v381, %v380
      %v385 = vpack.c.bf16 %v382, %v382
      %v386 = vld [vmem:[%s3] sm:$0xf]
      %v387 = vld [vmem:[%s3 + $0x4] sm:$0xf]
      %v388 = vld [vmem:[%s3 + $0x8] sm:$0xf]
      %v389 = vld [vmem:[%s3 + $0xc] sm:$0xf]
      %v390 = vld [vmem:[%s3 + $0x10] sm:$0xf]
      %v391 = vld [vmem:[%s3 + $0x14] sm:$0xf]
      %v392 = vld [vmem:[%s3 + $0x18] sm:$0xf]
      %v393 = vld [vmem:[%s3 + $0x1c] sm:$0xf]
      %v394 = vld [vmem:[%s3 + $0x20] sm:$0xf]
      %v395 = vld [vmem:[%s3 + $0x24] sm:$0xf]
      %v396 = vld [vmem:[%s3 + $0x28] sm:$0xf]
      %v397 = vld [vmem:[%s3 + $0x2c] sm:$0xf]
      %v398 = vld [vmem:[%s3 + $0x30] sm:$0xf]
      %v399 = vld [vmem:[%s3 + $0x34] sm:$0xf]
      %v400 = vld [vmem:[%s3 + $0x38] sm:$0xf]
      %v401 = vld [vmem:[%s3 + $0x3c] sm:$0xf]
      %v402 = vperm.slane %v239, 0
      %v419 = vunpack.c.l.b16 %v386
      %v420 = vunpack.c.l.b16 %v387
      %v421 = vunpack.c.l.b16 %v388
      %v422 = vunpack.c.l.b16 %v389
      %v423 = vunpack.c.l.b16 %v390
      %v424 = vunpack.c.l.b16 %v391
      %v425 = vunpack.c.l.b16 %v392
      %v426 = vunpack.c.l.b16 %v393
      %v427 = vunpack.c.l.b16 %v394
      %v428 = vunpack.c.l.b16 %v395
      %v429 = vunpack.c.l.b16 %v396
      %v430 = vunpack.c.l.b16 %v397
      %v431 = vunpack.c.l.b16 %v398
      %v432 = vunpack.c.l.b16 %v399
      %v433 = vunpack.c.l.b16 %v400
      %v434 = vunpack.c.l.b16 %v401
      %v435 = vpack.c.b16 %v420, %v419
      %v436 = vpack.c.b16 %v422, %v421
      %v437 = vpack.c.b16 %v424, %v423
      %v438 = vpack.c.b16 %v426, %v425
      %v439 = vpack.c.b16 %v428, %v427
      %v440 = vpack.c.b16 %v430, %v429
      %v441 = vpack.c.b16 %v432, %v431
      %v442 = vpack.c.b16 %v434, %v433
      %451 = vmatpush.bf16.msra.mxu0 %v442
      %452 = vmatpush.bf16.msra.mxu0 %v441
      %453 = vmatpush.bf16.msra.mxu0 %v440
      %454 = vmatpush.bf16.msra.mxu0 %v439
      %455 = vmatpush.bf16.msra.mxu0 %v438
      %456 = vmatpush.bf16.msra.mxu0 %v437
      %457 = vmatpush.bf16.msra.mxu0 %v436
      %458 = vmatpush.bf16.msra.mxu0 %v435
      %459 = vmatmul.bf16.gmra.mxu0 %v383
      %v460 = vpop.f32.mrf.mxu0
      %v461 = vadd.f32 %v402, %v460
      %v462 = vpop.f32.mrf.mxu0
      %v463 = vadd.f32 %v402, %v462
      %464 = vmatmul.bf16.gmra.mxu0 %v384
      %v465 = vpop.f32.mrf.mxu0
      %v466 = vadd.f32 %v402, %v465
      %v467 = vpop.f32.mrf.mxu0
      %v468 = vadd.f32 %v402, %v467
      %469 = vmatmul.bf16.gmra.mxu0 %v385
      %v470 = vpop.f32.mrf.mxu0
      %v471 = vadd.f32 %v402, %v470
      %v472 = vpop.f32.mrf.mxu0
      %473 = vdwg.mxu0
      %v474 = vmax.f32 %v461, 0.0
      %v475 = vmax.f32 %v463, 0.0
      %v476 = vmax.f32 %v466, 0.0
      %v477 = vmax.f32 %v468, 0.0
      %v478 = vmax.f32 %v471, 0.0
      %vm479 = vcmask 31744
      %480 = vst.msk [vmem:[%s226] sm:$0xff] %vm479, %v474
      %481 = vst.msk [vmem:[%s226 + $0x8] sm:$0xff] %vm479, %v475
      %482 = vst.msk [vmem:[%s226 + $0x10] sm:$0xff] %vm479, %v476
      %483 = vst.msk [vmem:[%s226 + $0x18] sm:$0xff] %vm479, %v477
      %484 = vst.msk [vmem:[%s226 + $0x20] sm:$0xff] %vm479, %v478
      %s485 = smul.u32 5, %s16
      %p486 = scmp.lt.s32.totalorder %s485, 9
      %s487 = scalar_select %p486, %s485, 9
      %s488 = smul.addr %s487, 8
      %s489 = scalar_lea.vmem %s5, %s488
      // Predicated region
      $region41: #{tpu_custom_call.1} parent=39 // pred_check
        %p490 = pneg %p144
      $region42: #{tpu_custom_call.1} parent=39 // pred_check_branch
        %492 = sbr.rel (%p490) target = $region44
      $region43: #{tpu_custom_call.1} parent=39 // pred_region
        %s493 = smul.u32 5, %s16
      $region44: #{tpu_custom_call.1} parent=39 // pred_fallthru
        _
    $region40: #{tpu_custom_call.1} parent=5 // pred_fallthru
      _
    %p494 = scmp.le.s32.totalorder 2, %s11
    // Predicated region
    $region45: #{tpu_custom_call.1} parent=5 // pred_check
      %p495 = pneg %p494
    $region46: #{tpu_custom_call.1} parent=5 // pred_check_branch
      %497 = sbr.rel (%p495) target = $region48
    $region47: #{tpu_custom_call.1} parent=5 // pred_region
      %s498 = ssub.s32 %s11, 2
      // Predicated region
      $region49: #{tpu_custom_call.1} parent=47 // pred_check
        %p499 = pneg %p150
      $region50: #{tpu_custom_call.1} parent=47 // pred_check_branch
        %501 = sbr.rel (%p499) target = $region52
      $region51: #{tpu_custom_call.1} parent=47 // pred_region
        %s502 = smul.u32 5, %s17
        %p503 = scmp.lt.s32.totalorder %s502, 9
        %s504 = scalar_select %p503, %s502, 9
        %s505 = smul.addr %s504, 8
        %s506 = scalar_lea.vmem %s5, %s505
      $region52: #{tpu_custom_call.1} parent=47 // pred_fallthru
        _
    $region48: #{tpu_custom_call.1} parent=5 // pred_fallthru
      _
  $region6: #{tpu_custom_call.1} parent=0 // loop_footer
    %s15 = sadd.s32 1, %s11
  $region7: #{tpu_custom_call.1} parent=0 // loop_footer_branch
    %10 = sbr.rel target = $region3
  $region8: #{tpu_custom_call.1} parent=0 // loop_exit
    _

// kernel: tpu_custom_call.1
$region0: #{tpu_custom_call.1}
  #allocation0 [shape = 'u32[]', space=smem, size = 0x4, offset = 0x4, fixed_abs, tag = 'smem constant byte address 0x4 - core index']
  #allocation1 [shape = 'u32[72,128]{1,0:T(1,128)}', space=vmem, size = 0x9000, scoped, tag = 'internal scratch']
  %s0 = inlined_call_operand.vmem [shape: f32[80,16], index: 0, kind: input, shape index: {}]
  %s1 = inlined_call_operand.vmem [shape: bf16[16,128], index: 1, kind: input, shape index: {}]
  %s2 = inlined_call_operand.vmem [shape: bf16[128,128], index: 2, kind: input, shape index: {}]
  %s3 = inlined_call_operand.vmem [shape: bf16[128,4], index: 3, kind: input, shape index: {}]
  %s4 = inlined_call_operand.vmem [shape: f32[3,128], index: 4, kind: input, shape index: {}]
  %s5 = inlined_call_operand.vmem [shape: f32[80,4], index: 5, kind: output, shape index: {}]
  %s6 = sld [smem:[#allocation0]]
  $region53: #{tpu_custom_call.1} parent=0
    _
  %s8 = ssub.s32 1, %s6
  %s9 = scalar_select 0, %s8, %s6
  loop: start=0, step=1, limit=4
  $region2: #{tpu_custom_call.1} parent=0 // loop_pre_header
    _
  $region3: #{tpu_custom_call.1} parent=0 // loop_header
    %s11 = sphi 0, %s15
    %p12 = scmp.ge.s32.totalorder %s11, 4
    %s21 = sphi 0, %s23
    %s24 = sphi 0, %s21
    %s25 = sphi 0, %s24
    %s41 = sphi 0, %s25
    %s45 = sphi 0, %s45
    %s47 = sphi 0, %s45
    %s48 = sphi 0, %s47
    %s62 = sphi 0, %s48
    %s66 = sphi 0, %s66
    %s68 = sphi 0, %s66
    %s69 = sphi 0, %s68
    %s83 = sphi 0, %s69
    %s87 = sphi 0, %s87
    %s89 = sphi 0, %s87
    %s90 = sphi 0, %s89
    %s104 = sphi 0, %s90
    %s108 = sphi 0, %s108
    %s110 = sphi 0, %s108
    %s111 = sphi 0, %s110
    %s125 = sphi 0, %s111
    %s131 = sphi 0, %s133
    %s134 = sphi 0, %s131
    %s135 = sphi 0, %s134
    %s151 = sphi 0, %s135
  $region4: #{tpu_custom_call.1} parent=0 // loop_header_branch
    %14 = sbr.rel (%p12) target = $region8
  $region5: #{tpu_custom_call.1} parent=0 // loop_body
    %s16 = ssub.s32 %s11, 1
    %s17 = ssub.s32 %s11, 2
    %s18 = sadd.s32 %s11, 1
    %s19 = ssub.s32 %s11, %s18
    %p20 = scmp.eq.s32.totalorder %s19, 0
    %s22 = sadd.s32 %s21, 1
    %s23 = scalar_select %p20, %s21, %s22
    %p26 = pneg %p20
    %p27 = scmp.eq.s32.totalorder %s11, 1
    %p28 = por %p26, %p27
    %p29 = scmp.ne.s32.totalorder %s21, %s24
    %p30 = scmp.eq.s32.totalorder %s11, 0
    %p31 = por %p29, %p30
    %p32 = scmp.ne.s32.totalorder %s21, %s24
    %p33 = scmp.eq.s32.totalorder %s16, 1
    %p34 = por %p32, %p33
    %p35 = scmp.ne.s32.totalorder %s24, %s25
    %p36 = scmp.eq.s32.totalorder %s16, 0
    %p37 = por %p35, %p36
    %p38 = scmp.ne.s32.totalorder %s24, %s25
    %p39 = scmp.eq.s32.totalorder %s17, 1
    %p40 = por %p38, %p39
    %p42 = scmp.ne.s32.totalorder %s25, %s41
    %p43 = scmp.eq.s32.totalorder %s17, 0
    %p44 = por %p42, %p43
    %s46 = sadd.s32 %s45, 1
    %p49 = scmp.eq.s32.totalorder %s11, 1
    %p50 = scmp.ne.s32.totalorder %s45, %s47
    %p51 = scmp.eq.s32.totalorder %s11, 0
    %p52 = por %p50, %p51
    %p53 = scmp.ne.s32.totalorder %s45, %s47
    %p54 = scmp.eq.s32.totalorder %s16, 1
    %p55 = por %p53, %p54
    %p56 = scmp.ne.s32.totalorder %s47, %s48
    %p57 = scmp.eq.s32.totalorder %s16, 0
    %p58 = por %p56, %p57
    %p59 = scmp.ne.s32.totalorder %s47, %s48
    %p60 = scmp.eq.s32.totalorder %s17, 1
    %p61 = por %p59, %p60
    %p63 = scmp.ne.s32.totalorder %s48, %s62
    %p64 = scmp.eq.s32.totalorder %s17, 0
    %p65 = por %p63, %p64
    %s67 = sadd.s32 %s66, 1
    %p70 = scmp.eq.s32.totalorder %s11, 1
    %p71 = scmp.ne.s32.totalorder %s66, %s68
    %p72 = scmp.eq.s32.totalorder %s11, 0
    %p73 = por %p71, %p72
    %p74 = scmp.ne.s32.totalorder %s66, %s68
    %p75 = scmp.eq.s32.totalorder %s16, 1
    %p76 = por %p74, %p75
    %p77 = scmp.ne.s32.totalorder %s68, %s69
    %p78 = scmp.eq.s32.totalorder %s16, 0
    %p79 = por %p77, %p78
    %p80 = scmp.ne.s32.totalorder %s68, %s69
    %p81 = scmp.eq.s32.totalorder %s17, 1
    %p82 = por %p80, %p81
    %p84 = scmp.ne.s32.totalorder %s69, %s83
    %p85 = scmp.eq.s32.totalorder %s17, 0
    %p86 = por %p84, %p85
    %s88 = sadd.s32 %s87, 1
    %p91 = scmp.eq.s32.totalorder %s11, 1
    %p92 = scmp.ne.s32.totalorder %s87, %s89
    %p93 = scmp.eq.s32.totalorder %s11, 0
    %p94 = por %p92, %p93
    %p95 = scmp.ne.s32.totalorder %s87, %s89
    %p96 = scmp.eq.s32.totalorder %s16, 1
    %p97 = por %p95, %p96
    %p98 = scmp.ne.s32.totalorder %s89, %s90
    %p99 = scmp.eq.s32.totalorder %s16, 0
    %p100 = por %p98, %p99
    %p101 = scmp.ne.s32.totalorder %s89, %s90
    %p102 = scmp.eq.s32.totalorder %s17, 1
    %p103 = por %p101, %p102
    %p105 = scmp.ne.s32.totalorder %s90, %s104
    %p106 = scmp.eq.s32.totalorder %s17, 0
    %p107 = por %p105, %p106
    %s109 = sadd.s32 %s108, 1
    %p112 = scmp.eq.s32.totalorder %s11, 1
    %p113 = scmp.ne.s32.totalorder %s108, %s110
    %p114 = scmp.eq.s32.totalorder %s11, 0
    %p115 = por %p113, %p114
    %p116 = scmp.ne.s32.totalorder %s108, %s110
    %p117 = scmp.eq.s32.totalorder %s16, 1
    %p118 = por %p116, %p117
    %p119 = scmp.ne.s32.totalorder %s110, %s111
    %p120 = scmp.eq.s32.totalorder %s16, 0
    %p121 = por %p119, %p120
    %p122 = scmp.ne.s32.totalorder %s110, %s111
    %p123 = scmp.eq.s32.totalorder %s17, 1
    %p124 = por %p122, %p123
    %p126 = scmp.ne.s32.totalorder %s111, %s125
    %p127 = scmp.eq.s32.totalorder %s17, 0
    %p128 = por %p126, %p127
    %s129 = ssub.s32 %s11, %s18
    %p130 = scmp.eq.s32.totalorder %s129, 0
    %s132 = sadd.s32 %s131, 1
    %s133 = scalar_select %p130, %s131, %s132
    %p136 = pneg %p130
    %p137 = scmp.eq.s32.totalorder %s11, 1
    %p138 = por %p136, %p137
    %p139 = scmp.ne.s32.totalorder %s131, %s134
    %p140 = scmp.eq.s32.totalorder %s11, 0
    %p141 = por %p139, %p140
    %p142 = scmp.ne.s32.totalorder %s131, %s134
    %p143 = scmp.eq.s32.totalorder %s16, 1
    %p144 = por %p142, %p143
    %p145 = scmp.ne.s32.totalorder %s134, %s135
    %p146 = scmp.eq.s32.totalorder %s16, 0
    %p147 = por %p145, %p146
    %p148 = scmp.ne.s32.totalorder %s134, %s135
    %p149 = scmp.eq.s32.totalorder %s17, 1
    %p150 = por %p148, %p149
    %p152 = scmp.ne.s32.totalorder %s135, %s151
    %p153 = scmp.eq.s32.totalorder %s17, 0
    %p154 = por %p152, %p153
    %p155 = scmp.le.s32.totalorder 1, %s11
    %p156 = scmp.lt.s32.totalorder %s11, 3
    %p157 = pnand %p155, %p156
    %p158 = pneg %p157
    // Predicated region
    $region9: #{tpu_custom_call.1} parent=5 // pred_check
      _
    $region10: #{tpu_custom_call.1} parent=5 // pred_check_branch
      %160 = sbr.rel (%p157) target = $region12
    $region11: #{tpu_custom_call.1} parent=5 // pred_region
      %s161 = ssub.s32 %s11, 1
      // Predicated region
      $region13: #{tpu_custom_call.1} parent=11 // pred_check
        %p162 = pneg %p58
      $region14: #{tpu_custom_call.1} parent=11 // pred_check_branch
        %164 = sbr.rel (%p162) target = $region16
      $region15: #{tpu_custom_call.1} parent=11 // pred_region
        _
      $region16: #{tpu_custom_call.1} parent=11 // pred_fallthru
        _
      // Predicated region
      $region17: #{tpu_custom_call.1} parent=11 // pred_check
        %p165 = pneg %p79
      $region18: #{tpu_custom_call.1} parent=11 // pred_check_branch
        %167 = sbr.rel (%p165) target = $region20
      $region19: #{tpu_custom_call.1} parent=11 // pred_region
        _
      $region20: #{tpu_custom_call.1} parent=11 // pred_fallthru
        _
      // Predicated region
      $region21: #{tpu_custom_call.1} parent=11 // pred_check
        %p168 = pneg %p100
      $region22: #{tpu_custom_call.1} parent=11 // pred_check_branch
        %170 = sbr.rel (%p168) target = $region24
      $region23: #{tpu_custom_call.1} parent=11 // pred_region
        _
      $region24: #{tpu_custom_call.1} parent=11 // pred_fallthru
        _
      // Predicated region
      $region25: #{tpu_custom_call.1} parent=11 // pred_check
        %p171 = pneg %p121
      $region26: #{tpu_custom_call.1} parent=11 // pred_check_branch
        %173 = sbr.rel (%p171) target = $region28
      $region27: #{tpu_custom_call.1} parent=11 // pred_region
        _
      $region28: #{tpu_custom_call.1} parent=11 // pred_fallthru
        _
    $region12: #{tpu_custom_call.1} parent=5 // pred_fallthru
      _
    %p174 = scmp.lt.s32.totalorder %s11, 2
    // Predicated region
    $region29: #{tpu_custom_call.1} parent=5 // pred_check
      %p175 = pneg %p174
    $region30: #{tpu_custom_call.1} parent=5 // pred_check_branch
      %177 = sbr.rel (%p175) target = $region32
    $region31: #{tpu_custom_call.1} parent=5 // pred_region
      // Predicated region
      $region33: #{tpu_custom_call.1} parent=31 // pred_check
        %p178 = pneg %p31
      $region34: #{tpu_custom_call.1} parent=31 // pred_check_branch
        %180 = sbr.rel (%p178) target = $region36
      $region35: #{tpu_custom_call.1} parent=31 // pred_region
        %s181 = smul.u32 5, %s11
        %p182 = scmp.lt.s32.totalorder %s181, 9
        %s183 = scalar_select %p182, %s181, 9
        %s184 = smul.addr %s183, 8
        %s185 = scalar_lea.vmem %s0, %s184
        %s186 = smul.u32 5, %s11
      $region36: #{tpu_custom_call.1} parent=31 // pred_fallthru
        _
    $region32: #{tpu_custom_call.1} parent=5 // pred_fallthru
      _
    %p187 = scmp.le.s32.totalorder 1, %s11
    %p188 = scmp.lt.s32.totalorder %s11, 3
    %p189 = pnand %p187, %p188
    %p190 = pneg %p189
    // Predicated region
    $region37: #{tpu_custom_call.1} parent=5 // pred_check
      _
    $region38: #{tpu_custom_call.1} parent=5 // pred_check_branch
      %192 = sbr.rel (%p189) target = $region40
    $region39: #{tpu_custom_call.1} parent=5 // pred_region
      %s193 = ssub.s32 %s11, 1
      %s194 = smul.u32 5, %s16
      %p195 = scmp.lt.s32.totalorder %s194, 9
      %s196 = scalar_select %p195, %s194, 9
      %s197 = smul.addr %s196, 8
      %s198 = scalar_lea.vmem %s0, %s197
      %p199 = pneg %p37
      %p200 = pneg %p34
      %p201 = pneg %p58
      %p202 = pneg %p55
      %p203 = pneg %p79
      %p204 = pneg %p76
      %p205 = pneg %p100
      %p206 = pneg %p97
      %p207 = pneg %p121
      %p208 = pneg %p118
      %p209 = pneg %p147
      %p210 = pneg %p144
      %s211 = smul.u32 5, %s16
      %p212 = scmp.lt.s32.totalorder %s211, 9
      %s213 = scalar_select %p212, %s211, 9
      %s214 = smul.addr %s213, 8
      %s215 = scalar_lea.vmem %s5, %s214
      %s216 = smul.u32 5, %s16
      %p217 = scmp.lt.s32.totalorder %s216, 9
      %s218 = scalar_select %p217, %s216, 9
      %s219 = smul.addr %s218, 8
      %s220 = scalar_lea.vmem %s0, %s219
      %s221 = smul.u32 5, %s16
      %s222 = smul.u32 5, %s16
      %p223 = scmp.lt.s32.totalorder %s222, 9
      %s224 = scalar_select %p223, %s222, 9
      %s225 = smul.addr %s224, 8
      %s226 = scalar_lea.vmem %s5, %s225
      %s227 = smul.u32 5, %s16
      %v229 = vld [vmem:[%s220] sm:$0xff]
      %v230 = vld [vmem:[%s220 + $0x8] sm:$0xff]
      %v231 = vld [vmem:[%s220 + $0x10] sm:$0xff]
      %v232 = vld [vmem:[%s220 + $0x18] sm:$0xff]
      %v233 = vld [vmem:[%s220 + $0x20] sm:$0xff]
      %v234 = vpack.c.bf16 %v230, %v229
      %v235 = vpack.c.bf16 %v232, %v231
      %v236 = vpack.c.bf16 %v233, %v233
      %v237 = vld [vmem:[%s4] sm:$0x1]
      %v238 = vld [vmem:[%s4 + $0x1] sm:$0x1]
      %v239 = vld [vmem:[%s4 + $0x2] sm:$0x1]
      %v240 = vld [vmem:[%s1] sm:$0xf]
      %v241 = vld [vmem:[%s1 + $0x4] sm:$0xf]
      %v242 = vperm.slane %v237, 0
      %v245 = vunpack.c.l.b16 %v240
      %v246 = vunpack.c.l.b16 %v241
      %v247 = vpack.c.b16 %v246, %v245
      %vm249 = vcmask 130048
      %v251 = vsel %vm249, %v234, 0
      %v254 = vsel %vm249, %v235, 0
      %v257 = vsel %vm249, %v236, 0
      %259 = vmatpush.bf16.msra.mxu0 0
      %260 = vmatpush.bf16.msra.mxu0 0
      %261 = vmatpush.bf16.msra.mxu0 0
      %262 = vmatpush.bf16.msra.mxu0 0
      %263 = vmatpush.bf16.msra.mxu0 0
      %264 = vmatpush.bf16.msra.mxu0 0
      %265 = vmatpush.bf16.msra.mxu0 0
      %266 = vmatpush.bf16.msra.mxu0 %v247
      %267 = vmatmul.bf16.gmra.mxu0 %v251
      %v268 = vpop.f32.mrf.mxu0
      %v269 = vadd.f32 %v242, %v268
      %v270 = vpop.f32.mrf.mxu0
      %v271 = vadd.f32 %v242, %v270
      %272 = vmatmul.bf16.gmra.mxu0 %v254
      %v273 = vpop.f32.mrf.mxu0
      %v274 = vadd.f32 %v242, %v273
      %v275 = vpop.f32.mrf.mxu0
      %v276 = vadd.f32 %v242, %v275
      %277 = vmatmul.bf16.gmra.mxu0 %v257
      %v278 = vpop.f32.mrf.mxu0
      %v279 = vadd.f32 %v242, %v278
      %v280 = vpop.f32.mrf.mxu0
      %281 = vdwg.mxu0
      %v282 = vmax.f32 %v269, 0.0
      %v283 = vmax.f32 %v271, 0.0
      %v284 = vmax.f32 %v274, 0.0
      %v285 = vmax.f32 %v276, 0.0
      %v286 = vmax.f32 %v279, 0.0
      %v287 = vpack.c.bf16 %v283, %v282
      %v288 = vpack.c.bf16 %v285, %v284
      %v289 = vpack.c.bf16 %v286, %v286
      %v290 = vld [vmem:[%s2] sm:$0xf]
      %v291 = vld [vmem:[%s2 + $0x4] sm:$0xf]
      %v292 = vld [vmem:[%s2 + $0x8] sm:$0xf]
      %v293 = vld [vmem:[%s2 + $0xc] sm:$0xf]
      %v294 = vld [vmem:[%s2 + $0x10] sm:$0xf]
      %v295 = vld [vmem:[%s2 + $0x14] sm:$0xf]
      %v296 = vld [vmem:[%s2 + $0x18] sm:$0xf]
      %v297 = vld [vmem:[%s2 + $0x1c] sm:$0xf]
      %v298 = vld [vmem:[%s2 + $0x20] sm:$0xf]
      %v299 = vld [vmem:[%s2 + $0x24] sm:$0xf]
      %v300 = vld [vmem:[%s2 + $0x28] sm:$0xf]
      %v301 = vld [vmem:[%s2 + $0x2c] sm:$0xf]
      %v302 = vld [vmem:[%s2 + $0x30] sm:$0xf]
      %v303 = vld [vmem:[%s2 + $0x34] sm:$0xf]
      %v304 = vld [vmem:[%s2 + $0x38] sm:$0xf]
      %v305 = vld [vmem:[%s2 + $0x3c] sm:$0xf]
      %v306 = vperm.slane %v238, 0
      %v323 = vunpack.c.l.b16 %v290
      %v324 = vunpack.c.l.b16 %v291
      %v325 = vunpack.c.l.b16 %v292
      %v326 = vunpack.c.l.b16 %v293
      %v327 = vunpack.c.l.b16 %v294
      %v328 = vunpack.c.l.b16 %v295
      %v329 = vunpack.c.l.b16 %v296
      %v330 = vunpack.c.l.b16 %v297
      %v331 = vunpack.c.l.b16 %v298
      %v332 = vunpack.c.l.b16 %v299
      %v333 = vunpack.c.l.b16 %v300
      %v334 = vunpack.c.l.b16 %v301
      %v335 = vunpack.c.l.b16 %v302
      %v336 = vunpack.c.l.b16 %v303
      %v337 = vunpack.c.l.b16 %v304
      %v338 = vunpack.c.l.b16 %v305
      %v339 = vpack.c.b16 %v324, %v323
      %v340 = vpack.c.b16 %v326, %v325
      %v341 = vpack.c.b16 %v328, %v327
      %v342 = vpack.c.b16 %v330, %v329
      %v343 = vpack.c.b16 %v332, %v331
      %v344 = vpack.c.b16 %v334, %v333
      %v345 = vpack.c.b16 %v336, %v335
      %v346 = vpack.c.b16 %v338, %v337
      %355 = vmatpush.bf16.msra.mxu0 %v346
      %356 = vmatpush.bf16.msra.mxu0 %v345
      %357 = vmatpush.bf16.msra.mxu0 %v344
      %358 = vmatpush.bf16.msra.mxu0 %v343
      %359 = vmatpush.bf16.msra.mxu0 %v342
      %360 = vmatpush.bf16.msra.mxu0 %v341
      %361 = vmatpush.bf16.msra.mxu0 %v340
      %362 = vmatpush.bf16.msra.mxu0 %v339
      %363 = vmatmul.bf16.gmra.mxu0 %v287
      %v364 = vpop.f32.mrf.mxu0
      %v365 = vadd.f32 %v306, %v364
      %v366 = vpop.f32.mrf.mxu0
      %v367 = vadd.f32 %v306, %v366
      %368 = vmatmul.bf16.gmra.mxu0 %v288
      %v369 = vpop.f32.mrf.mxu0
      %v370 = vadd.f32 %v306, %v369
      %v371 = vpop.f32.mrf.mxu0
      %v372 = vadd.f32 %v306, %v371
      %373 = vmatmul.bf16.gmra.mxu0 %v289
      %v374 = vpop.f32.mrf.mxu0
      %v375 = vadd.f32 %v306, %v374
      %v376 = vpop.f32.mrf.mxu0
      %377 = vdwg.mxu0
      %v378 = vmax.f32 %v365, 0.0
      %v379 = vmax.f32 %v367, 0.0
      %v380 = vmax.f32 %v370, 0.0
      %v381 = vmax.f32 %v372, 0.0
      %v382 = vmax.f32 %v375, 0.0
      %v383 = vpack.c.bf16 %v379, %v378
      %v384 = vpack.c.bf16 %v381, %v380
      %v385 = vpack.c.bf16 %v382, %v382
      %v386 = vld [vmem:[%s3] sm:$0xf]
      %v387 = vld [vmem:[%s3 + $0x4] sm:$0xf]
      %v388 = vld [vmem:[%s3 + $0x8] sm:$0xf]
      %v389 = vld [vmem:[%s3 + $0xc] sm:$0xf]
      %v390 = vld [vmem:[%s3 + $0x10] sm:$0xf]
      %v391 = vld [vmem:[%s3 + $0x14] sm:$0xf]
      %v392 = vld [vmem:[%s3 + $0x18] sm:$0xf]
      %v393 = vld [vmem:[%s3 + $0x1c] sm:$0xf]
      %v394 = vld [vmem:[%s3 + $0x20] sm:$0xf]
      %v395 = vld [vmem:[%s3 + $0x24] sm:$0xf]
      %v396 = vld [vmem:[%s3 + $0x28] sm:$0xf]
      %v397 = vld [vmem:[%s3 + $0x2c] sm:$0xf]
      %v398 = vld [vmem:[%s3 + $0x30] sm:$0xf]
      %v399 = vld [vmem:[%s3 + $0x34] sm:$0xf]
      %v400 = vld [vmem:[%s3 + $0x38] sm:$0xf]
      %v401 = vld [vmem:[%s3 + $0x3c] sm:$0xf]
      %v402 = vperm.slane %v239, 0
      %v419 = vunpack.c.l.b16 %v386
      %v420 = vunpack.c.l.b16 %v387
      %v421 = vunpack.c.l.b16 %v388
      %v422 = vunpack.c.l.b16 %v389
      %v423 = vunpack.c.l.b16 %v390
      %v424 = vunpack.c.l.b16 %v391
      %v425 = vunpack.c.l.b16 %v392
      %v426 = vunpack.c.l.b16 %v393
      %v427 = vunpack.c.l.b16 %v394
      %v428 = vunpack.c.l.b16 %v395
      %v429 = vunpack.c.l.b16 %v396
      %v430 = vunpack.c.l.b16 %v397
      %v431 = vunpack.c.l.b16 %v398
      %v432 = vunpack.c.l.b16 %v399
      %v433 = vunpack.c.l.b16 %v400
      %v434 = vunpack.c.l.b16 %v401
      %v435 = vpack.c.b16 %v420, %v419
      %v436 = vpack.c.b16 %v422, %v421
      %v437 = vpack.c.b16 %v424, %v423
      %v438 = vpack.c.b16 %v426, %v425
      %v439 = vpack.c.b16 %v428, %v427
      %v440 = vpack.c.b16 %v430, %v429
      %v441 = vpack.c.b16 %v432, %v431
      %v442 = vpack.c.b16 %v434, %v433
      %451 = vmatpush.bf16.msra.mxu0 %v442
      %452 = vmatpush.bf16.msra.mxu0 %v441
      %453 = vmatpush.bf16.msra.mxu0 %v440
      %454 = vmatpush.bf16.msra.mxu0 %v439
      %455 = vmatpush.bf16.msra.mxu0 %v438
      %456 = vmatpush.bf16.msra.mxu0 %v437
      %457 = vmatpush.bf16.msra.mxu0 %v436
      %458 = vmatpush.bf16.msra.mxu0 %v435
      %459 = vmatmul.bf16.gmra.mxu0 %v383
      %v460 = vpop.f32.mrf.mxu0
      %v461 = vadd.f32 %v402, %v460
      %v462 = vpop.f32.mrf.mxu0
      %v463 = vadd.f32 %v402, %v462
      %464 = vmatmul.bf16.gmra.mxu0 %v384
      %v465 = vpop.f32.mrf.mxu0
      %v466 = vadd.f32 %v402, %v465
      %v467 = vpop.f32.mrf.mxu0
      %v468 = vadd.f32 %v402, %v467
      %469 = vmatmul.bf16.gmra.mxu0 %v385
      %v470 = vpop.f32.mrf.mxu0
      %v471 = vadd.f32 %v402, %v470
      %v472 = vpop.f32.mrf.mxu0
      %473 = vdwg.mxu0
      %v474 = vmax.f32 %v461, 0.0
      %v475 = vmax.f32 %v463, 0.0
      %v476 = vmax.f32 %v466, 0.0
      %v477 = vmax.f32 %v468, 0.0
      %v478 = vmax.f32 %v471, 0.0
      %vm479 = vcmask 31744
      %480 = vst.msk [vmem:[%s226] sm:$0xff] %vm479, %v474
      %481 = vst.msk [vmem:[%s226 + $0x8] sm:$0xff] %vm479, %v475
      %482 = vst.msk [vmem:[%s226 + $0x10] sm:$0xff] %vm479, %v476
      %483 = vst.msk [vmem:[%s226 + $0x18] sm:$0xff] %vm479, %v477
      %484 = vst.msk [vmem:[%s226 + $0x20] sm:$0xff] %vm479, %v478
      %s485 = smul.u32 5, %s16
      %p486 = scmp.lt.s32.totalorder %s485, 9
      %s487 = scalar_select %p486, %s485, 9
      %s488 = smul.addr %s487, 8
      %s489 = scalar_lea.vmem %s5, %s488
      // Predicated region
      $region41: #{tpu_custom_call.1} parent=39 // pred_check
        %p490 = pneg %p144
      $region42: #{tpu_custom_call.1} parent=39 // pred_check_branch
        %492 = sbr.rel (%p490) target = $region44
      $region43: #{tpu_custom_call.1} parent=39 // pred_region
        %s493 = smul.u32 5, %s16
      $region44: #{tpu_custom_call.1} parent=39 // pred_fallthru
        _
    $region40: #{tpu_custom_call.1} parent=5 // pred_fallthru
      _
    %p494 = scmp.le.s32.totalorder 2, %s11
    // Predicated region
    $region45: #{tpu_custom_call.1} parent=5 // pred_check
      %p495 = pneg %p494
    $region46: #{tpu_custom_call.1} parent=5 // pred_check_branch
      %497 = sbr.rel (%p495) target = $region48
    $region47: #{tpu_custom_call.1} parent=5 // pred_region
      %s498 = ssub.s32 %s11, 2
      // Predicated region
      $region49: #{tpu_custom_call.1} parent=47 // pred_check
        %p499 = pneg %p150
      $region50: #{tpu_custom_call.1} parent=47 // pred_check_branch
        %501 = sbr.rel (%p499) target = $region52
      $region51: #{tpu_custom_call.1} parent=47 // pred_region
        %s502 = smul.u32 5, %s17
        %p503 = scmp.lt.s32.totalorder %s502, 9
        %s504 = scalar_select %p503, %s502, 9
        %s505 = smul.addr %s504, 8
        %s506 = scalar_lea.vmem %s5, %s505
      $region52: #{tpu_custom_call.1} parent=47 // pred_fallthru
        _
    $region48: #{tpu_custom_call.1} parent=5 // pred_fallthru
      _
  $region6: #{tpu_custom_call.1} parent=0 // loop_footer
    %s15 = sadd.s32 1, %s11
  $region7: #{tpu_custom_call.1} parent=0 // loop_footer_branch
    %10 = sbr.rel target = $region3
  $region8: #{tpu_custom_call.1} parent=0 // loop_exit
    _

</llo_original>
